<compile_context>
chip_gen: v7x
topology: tpu7x:2x2x1
jax: 0.10.0
libtpu: 0.0.40
codegen_flags: <defaults>
</compile_context>

<pallas_src>
import functools

import jax
import jax.numpy as jnp
from jax.experimental import pallas as pl
from jax.experimental.pallas import tpu as pltpu

NEG = -1.0e30          # finite "-inf" sentinel (f32-safe over realistic T)
IMPOSSIBLE = -1.0e29   # log-likelihoods below this => unreachable supervision
LANE = 128


def _lse3(a, b, c):
    """Elementwise log(exp(a)+exp(b)+exp(c)); finite-sentinel safe, no guards."""
    m = jnp.maximum(jnp.maximum(a, b), c)
    return m + jnp.log(jnp.exp(a - m) + jnp.exp(b - m) + jnp.exp(c - m))


# ---------------------------------------------------------------------------
# Stage 1: emission gather as an MXU matmul on raw logits, minus row-lse.
# ---------------------------------------------------------------------------
def _emit_kernel(logits_ref, onehot_ref, valid_ref, emit_ref):
    x = logits_ref[...]                                       # (TT1, V) native dtype
    xf = x.astype(jnp.float32)
    m = jnp.max(xf, axis=-1, keepdims=True)
    lse = m + jnp.log(jnp.sum(jnp.exp(xf - m), axis=-1, keepdims=True))  # (TT1, 1)
    oh = onehot_ref[...].astype(x.dtype)                      # (V, Lp), exact 0/1
    # Each valid one-hot column sums to 1 => (x - lse) @ oh == x @ oh - lse.
    e = jnp.dot(x, oh, preferred_element_type=jnp.float32)    # (TT1, Lp) on MXU
    emit_ref[...] = e - lse + valid_ref[...]                  # sentinel past 2*len+1


# ---------------------------------------------------------------------------
# Stage 2: alpha recurrence (sequential over T, TT2 timesteps per grid step).
# ---------------------------------------------------------------------------
def _ctc_dp_kernel(emit_ref, masks_ref, loss_ref, alpha_ref, *, t_total):
    t_blk = pl.program_id(1)
    bt, tt, lp_dim = emit_ref.shape
    ragged = (t_total % tt) != 0                               # static

    @pl.when(t_blk == 0)
    def _():
        # Virtual prior alpha_{-1}: 0 at position 0, sentinel elsewhere.  One
        # uniform recurrence step then reproduces the standard CTC init.
        lane = jax.lax.broadcasted_iota(jnp.int32, (bt, lp_dim), 1)
        alpha_ref[...] = jnp.where(lane == 0, 0.0, NEG).astype(jnp.float32)

    skip_add = masks_ref[0]                                    # (bt, Lp)
    t0 = t_blk * tt

    # Fully unrolled inner loop (static indices -> plain vector loads).  Lp is
    # padded to >= L+2, so the roll wraparound only moves masked lanes into
    # positions 0/1 -- no lane masks needed in the serial loop.
    alpha = alpha_ref[...]
    for i in range(tt):
        e = emit_ref[:, i, :]                                  # (bt, Lp)
        s1 = pltpu.roll(alpha, 1, axis=1)
        s2 = pltpu.roll(alpha, 2, axis=1) + skip_add
        new = _lse3(alpha, s1, s2) + e
        if ragged:                                             # compiled out when T % tt == 0
            new = jnp.where(t0 + i < t_total, new, alpha)
        alpha = new
    alpha_ref[...] = alpha

    @pl.when(t_blk == pl.num_programs(1) - 1)
    def _():
        a = alpha + masks_ref[1]                               # + final mask
        m2 = jnp.max(a, axis=-1, keepdims=True)
        ll = m2 + jnp.log(jnp.sum(jnp.exp(a - m2), axis=-1, keepdims=True))
        # Unreachable supervision -> +inf (matches k2's inf, masked by caller).
        loss_ref[...] = jnp.where(ll > IMPOSSIBLE, -ll, jnp.inf)


# ---------------------------------------------------------------------------
# Host-side preparation of the blank-interleaved label structure.
# ---------------------------------------------------------------------------
def _build_aux(targets, lengths, vocab, blank=0):
    """Extended-label one-hot in (B, V, Lp) bf16 and additive sentinel masks."""
    targets = targets.astype(jnp.int32)
    lengths = lengths.astype(jnp.int32)
    B, S = targets.shape
    L = 2 * S + 1
    # Lp >= L + 2 so the roll-by-1/2 wraparound always lands on masked lanes.
    Lp = ((L + 2 + LANE - 1) // LANE) * LANE
    pos = jnp.arange(Lp, dtype=jnp.int32)
    in_range = pos < L
    if S > 0:
        lab_idx = jnp.clip(pos // 2, 0, S - 1)
        ext = jnp.where(((pos % 2 == 1) & in_range)[None, :],
                        targets[:, lab_idx], blank)            # (B, Lp)
    else:  # empty-target edge case: all-blank extended sequence
        ext = jnp.full((B, Lp), blank, jnp.int32)

    valid = (pos[None, :] < (2 * lengths[:, None] + 1)) & in_range[None, :]
    # Direct (B, V, Lp) bf16 build: no f32 one_hot intermediate, no transpose.
    iota_v = jnp.arange(vocab, dtype=jnp.int32)
    onehot_t = ((ext[:, None, :] == iota_v[None, :, None])
                & valid[:, None, :]).astype(jnp.bfloat16)       # (B, V, Lp)

    prev2 = jnp.concatenate(
        [jnp.full((B, 2), -1, jnp.int32), ext[:, :-2]], axis=1)
    skip_ok = (pos[None, :] >= 2) & (ext != blank) & (ext != prev2) & valid
    init_ok = (pos[None, :] == 0) | ((pos[None, :] == 1) & (lengths[:, None] > 0))
    final_ok = (pos[None, :] == 2 * lengths[:, None]) | (
        (pos[None, :] == 2 * lengths[:, None] - 1) & (lengths[:, None] > 0))

    def add(mask):
        return jnp.where(mask, 0.0, NEG).astype(jnp.float32)

    return onehot_t, add(valid), add(init_ok), add(skip_ok), add(final_ok)


# ---------------------------------------------------------------------------
# Tile / VMEM budget helpers.
# ---------------------------------------------------------------------------
def _stage1_time_block(T, V, itemsize, cap=256):
    """MXU M-tile for stage 1: big, multiple of 128 when large, ~8 MiB logits."""
    budget = 8 << 20
    tt_mem = max(8, budget // max(V * itemsize, 1))
    tt = min(cap, tt_mem, T)
    if tt >= T:
        return T
    if tt >= 128:
        return (tt // 128) * 128
    return max(8, (tt // 8) * 8)


def _stage2_time_block(T, cap=32):
    """Unroll depth of the serial DP loop (ragged tail handled in-kernel)."""
    if T <= cap:
        return T
    return max(8, (cap // 8) * 8)


def _vmem_cap():
    try:
        cap = getattr(pltpu.get_tpu_info(), "vmem_capacity_bytes", None)
        if cap:
            return int(cap * 0.85)     # headroom for masks / sems / Mosaic scratch
    except Exception:
        pass
    return 48 << 20                    # safe on v7x's 64 MiB per-core VMEM


def _vmem_limit(block_bytes):
    want = 2 * block_bytes + (4 << 20)  # double-buffered blocks + headroom
    return int(min(max(want, 16 << 20), _vmem_cap()))


# ---------------------------------------------------------------------------
# Public wrapper.
# ---------------------------------------------------------------------------
def wfst_ctc_loss(logits, targets, lengths, reduction="mean",
                  time_block=32, batch_block=None):
    """JAX/Pallas equivalent of WfstCTCLoss.forward -> {'loss': scalar}."""
    B, T, V = logits.shape
    onehot_t, valid_add, _init_add, skip_add, final_add = _build_aux(
        targets, lengths, V)
    Lp = onehot_t.shape[-1]

    # Decoupled time tiles: TT1 = stage-1 MXU M-tile, TT2 = DP unroll depth.
    TT1 = _stage1_time_block(T, V, logits.dtype.itemsize)
    TT2 = _stage2_time_block(T, time_block)

    if batch_block is None:
        # >=2 parallel grid steps when possible (v7x has 2 TensorCores/chip).
        bt = B // 2 if (B % 2 == 0 and (B // 2) % 8 == 0) else B
    else:
        bt = batch_block
    assert B % bt == 0 and (bt == B or bt % 8 == 0)

    n_t1 = pl.cdiv(T, TT1)
    n_t2 = pl.cdiv(T, TT2)

    # ---- stage 1: emissions (B, T, Lp) via per-batch MXU matmul ------------
    s1_bytes = (TT1 * V * logits.dtype.itemsize + V * Lp * 2
                + Lp * 4 + TT1 * Lp * 4)
    emit = pl.pallas_call(
        _emit_kernel,
        out_shape=jax.ShapeDtypeStruct((B, T, Lp), jnp.float32),
        grid_spec=pltpu.PrefetchScalarGridSpec(
            num_scalar_prefetch=0,
            grid=(B, n_t1),
            in_specs=[
                pl.BlockSpec((None, TT1, V), lambda b, t: (b, t, 0)),  # logits
                pl.BlockSpec((None, V, Lp), lambda b, t: (b, 0, 0)),   # one-hot^T
                pl.BlockSpec((None, 1, Lp), lambda b, t: (b, 0, 0)),   # valid mask
            ],
            out_specs=pl.BlockSpec((None, TT1, Lp), lambda b, t: (b, t, 0)),
        ),
        compiler_params=pltpu.CompilerParams(
            dimension_semantics=("parallel", "parallel"),
            vmem_limit_bytes=_vmem_limit(s1_bytes)),
    )(logits, onehot_t, valid_add[:, None, :])

    # ---- stage 2: alpha recurrence over the sequential T axis --------------
    masks = jnp.stack([skip_add, final_add], axis=0)           # (2, B, Lp)
    s2_bytes = bt * TT2 * Lp * 4 + 2 * bt * Lp * 4 + bt * 4 + bt * Lp * 4
    dp_kernel = functools.partial(_ctc_dp_kernel, t_total=T)
    loss_b = pl.pallas_call(
        dp_kernel,
        out_shape=jax.ShapeDtypeStruct((B, 1), jnp.float32),
        grid_spec=pltpu.PrefetchScalarGridSpec(
            num_scalar_prefetch=0,
            grid=(B // bt, n_t2),
            in_specs=[
                pl.BlockSpec((bt, TT2, Lp), lambda b, t: (b, t, 0)),   # emissions
                pl.BlockSpec((2, bt, Lp), lambda b, t: (0, b, 0)),     # skip/final
            ],
            out_specs=pl.BlockSpec((bt, 1), lambda b, t: (b, 0)),
            scratch_shapes=[pltpu.VMEM((bt, Lp), jnp.float32)],        # alpha DP
        ),
        compiler_params=pltpu.CompilerParams(
            dimension_semantics=("parallel", "arbitrary"),
            vmem_limit_bytes=_vmem_limit(s2_bytes)),
    )(emit, masks)

    loss_b = loss_b[:, 0]
    total = jnp.sum(jnp.where(jnp.isfinite(loss_b), loss_b, 0.0))
    if reduction in ("none", "sum"):   # matches the reference module verbatim
        loss = total
    else:  # 'mean'
        loss = total / B
    return {"loss": loss}


# ---------------------------------------------------------------------------
# Pure-JAX reference (standard init + concatenate shifts) for correctness.
# ---------------------------------------------------------------------------
def _ref_loss(logits, targets, lengths, reduction="mean"):
    B, T, V = logits.shape
    onehot_t, valid_add, init_add, skip_add, final_add = _build_aux(
        targets, lengths, V)
    lp = jax.nn.log_softmax(logits.astype(jnp.float32), axis=-1)
    emit = jnp.einsum("btv,bvl->tbl", lp, onehot_t.astype(jnp.float32))
    emit = emit + valid_add[None]
    alpha = emit[0] + init_add

    def step(alpha, e):
        s1 = jnp.concatenate(
            [jnp.full((B, 1), NEG, jnp.float32), alpha[:, :-1]], axis=1)
        s2 = jnp.concatenate(
            [jnp.full((B, 2), NEG, jnp.float32), alpha[:, :-2]], axis=1)
        s2 = s2 + skip_add
        return _lse3(alpha, s1, s2) + e, None

    alpha, _ = jax.lax.scan(step, alpha, emit[1:])
    a = alpha + final_add
    m = jnp.max(a, axis=-1, keepdims=True)
    ll = (m + jnp.log(jnp.sum(jnp.exp(a - m), axis=-1, keepdims=True)))[:, 0]
    loss_b = jnp.where(ll > IMPOSSIBLE, -ll, jnp.inf)
    total = jnp.sum(jnp.where(jnp.isfinite(loss_b), loss_b, 0.0))
    return total if reduction in ("none", "sum") else total / B


if __name__ == "__main__":
    key = jax.random.PRNGKey(0)
    B, T, V, S = 2, 8, 16, 4  # batch, time, vocab (blank=0), max target length
    k1, k2 = jax.random.split(key)
    logits = jax.random.normal(k1, (B, T, V), dtype=jnp.float32)
    targets = jax.random.randint(k2, (B, S), 1, V, dtype=jnp.int32)  # no blanks
    lengths = jnp.array([4, 3], dtype=jnp.int32)

    out = wfst_ctc_loss(logits, targets, lengths, reduction="mean")
    loss = jax.block_until_ready(out["loss"])

    ref = jax.block_until_ready(_ref_loss(logits, targets, lengths, "mean"))
    assert jnp.isfinite(loss), loss
    assert jnp.allclose(loss, ref, rtol=1e-4, atol=1e-4), (loss, ref)
    print("KERNEL_OK")
</pallas_src>

<mosaic_0001>
module attributes {stable_mosaic.version = 11 : i64} {
  func.func @_emit_kernel(%arg0: i32, %arg1: i32, %arg2: memref<1x8x16xf32, #tpu.memory_space<vmem>>, %arg3: memref<1x16x128xbf16, #tpu.memory_space<vmem>>, %arg4: memref<1x1x128xf32, #tpu.memory_space<vmem>>, %arg5: memref<1x8x128xf32, #tpu.memory_space<vmem>>) attributes {dimension_semantics = [#tpu.dimension_semantics<parallel>, #tpu.dimension_semantics<parallel>], iteration_bounds = array<i64: 2, 1>, scalar_prefetch = 0 : i64, scratch_operands = 0 : i64, tpu.core_type = #tpu.core_type<tc>, window_params = [{transform_indices = @transform_0, window_bounds = array<i64: 1, 8, 16>}, {transform_indices = @transform_1, window_bounds = array<i64: 1, 16, 128>}, {transform_indices = @transform_2, window_bounds = array<i64: 1, 1, 128>}, {transform_indices = @transform_3, window_bounds = array<i64: 1, 8, 128>}]} {
    %c0 = arith.constant 0 : index
    %c0_0 = arith.constant 0 : index
    %c0_1 = arith.constant 0 : index
    %0 = vector.load %arg2[%c0, %c0_0, %c0_1] : memref<1x8x16xf32, #tpu.memory_space<vmem>>, vector<1x8x16xf32>
    %1 = vector.shape_cast %0 : vector<1x8x16xf32> to vector<8x16xf32>
    %cst = arith.constant dense<0xFF800000> : vector<8xf32>
    %2 = vector.multi_reduction <maximumf>, %1, %cst [1] : vector<8x16xf32> to vector<8xf32>
    %3 = vector.shape_cast %2 : vector<8xf32> to vector<8x1xf32>
    %4 = vector.broadcast %3 : vector<8x1xf32> to vector<8x16xf32>
    %5 = arith.subf %1, %4 : vector<8x16xf32>
    %6 = math.exp %5 : vector<8x16xf32>
    %cst_2 = arith.constant dense<0.000000e+00> : vector<8xf32>
    %7 = vector.multi_reduction <add>, %6, %cst_2 [1] : vector<8x16xf32> to vector<8xf32>
    %8 = vector.shape_cast %7 : vector<8xf32> to vector<8x1xf32>
    %9 = math.log %8 : vector<8x1xf32>
    %10 = arith.addf %3, %9 : vector<8x1xf32>
    %c0_3 = arith.constant 0 : index
    %c0_4 = arith.constant 0 : index
    %c0_5 = arith.constant 0 : index
    %11 = vector.load %arg3[%c0_3, %c0_4, %c0_5] : memref<1x16x128xbf16, #tpu.memory_space<vmem>>, vector<1x16x128xbf16>
    %12 = vector.shape_cast %11 : vector<1x16x128xbf16> to vector<16x128xbf16>
    %13 = arith.extf %12 : vector<16x128xbf16> to vector<16x128xf32>
    %cst_6 = arith.constant dense<0.000000e+00> : vector<8x128xf32>
    %14 = tpu.matmul %1, %13, %cst_6 {dimension_numbers = #tpu.dot_dimension_numbers<[1], [0], [0], [1], [0, 0, 1, 1], [], []>} : vector<8x16xf32>, vector<16x128xf32>, vector<8x128xf32> -> vector<8x128xf32>
    %15 = vector.broadcast %10 : vector<8x1xf32> to vector<8x128xf32>
    %16 = arith.subf %14, %15 : vector<8x128xf32>
    %c0_7 = arith.constant 0 : index
    %c0_8 = arith.constant 0 : index
    %c0_9 = arith.constant 0 : index
    %17 = vector.load %arg4[%c0_7, %c0_8, %c0_9] : memref<1x1x128xf32, #tpu.memory_space<vmem>>, vector<1x1x128xf32>
    %18 = vector.shape_cast %17 : vector<1x1x128xf32> to vector<1x128xf32>
    %19 = vector.broadcast %18 : vector<1x128xf32> to vector<8x128xf32>
    %20 = arith.addf %16, %19 : vector<8x128xf32>
    %c0_10 = arith.constant 0 : index
    %c0_11 = arith.constant 0 : index
    %c0_12 = arith.constant 0 : index
    %21 = vector.load %arg5[%c0_10, %c0_11, %c0_12] : memref<1x8x128xf32, #tpu.memory_space<vmem>>, vector<1x8x128xf32>
    %22 = vector.shape_cast %21 : vector<1x8x128xf32> to vector<8x128xf32>
    %23 = vector.shape_cast %20 : vector<8x128xf32> to vector<1x8x128xf32>
    tpu.vector_store %arg5[%c0_10, %c0_11, %c0_12], %23 {strides = array<i32>} : memref<1x8x128xf32, #tpu.memory_space<vmem>>, vector<1x8x128xf32>,
    return
  }
  func.func @transform_0(%arg0: i32, %arg1: i32) -> (i32, i32, i32) {
    %c0_i32 = arith.constant 0 : i32
    %c0_i32_0 = arith.constant 0 : i32
    return %arg0, %arg1, %c0_i32 : i32, i32, i32
  }
  func.func @transform_1(%arg0: i32, %arg1: i32) -> (i32, i32, i32) {
    %c0_i32 = arith.constant 0 : i32
    %c0_i32_0 = arith.constant 0 : i32
    %c0_i32_1 = arith.constant 0 : i32
    return %arg0, %c0_i32, %c0_i32_0 : i32, i32, i32
  }
  func.func @transform_2(%arg0: i32, %arg1: i32) -> (i32, i32, i32) {
    %c0_i32 = arith.constant 0 : i32
    %c0_i32_0 = arith.constant 0 : i32
    %c0_i32_1 = arith.constant 0 : i32
    return %arg0, %c0_i32, %c0_i32_0 : i32, i32, i32
  }
  func.func @transform_3(%arg0: i32, %arg1: i32) -> (i32, i32, i32) {
    %c0_i32 = arith.constant 0 : i32
    %c0_i32_0 = arith.constant 0 : i32
    return %arg0, %arg1, %c0_i32 : i32, i32, i32
  }
}

</mosaic_0001>

<llo_original>
// kernel: tpu_custom_call.1
$region0: #{tpu_custom_call.1}
  #allocation0 [shape = 'u32[]', space=smem, size = 0x4, offset = 0x4, fixed_abs, tag = 'smem constant byte address 0x4 - core index']
  #allocation1 [shape = 'u32[144,128]{1,0:T(1,128)}', space=vmem, size = 0x12000, scoped, tag = 'internal scratch']
  %s0 = inlined_call_operand.hbm [shape: f32[2,8,16], index: 0, kind: input, shape index: {}]
  %s1 = inlined_call_operand.hbm [shape: bf16[2,16,128], index: 1, kind: input, shape index: {}]
  %s2 = inlined_call_operand.vmem [shape: f32[2,1,128], index: 2, kind: input, shape index: {}]
  %s3 = inlined_call_operand.hbm [shape: f32[2,8,128], index: 3, kind: output, shape index: {}]
  %s4 = sld [smem:[#allocation0]]
  $region53: #{tpu_custom_call.1} parent=0
    _
  %s6 = ssub.s32 1, %s4
  %s7 = scalar_select 0, %s6, %s4
  $region1: #{tpu_custom_call.1} parent=0
    #allocation2 [shape = 'u8[8192]{0}', space=vmem, size = 0x2000, scoped, tag = 'input window, operand 0']
    #allocation3 [shape = 's32[2]{0}', space=sflag, size = 0x8, scoped, tag = 'scoped memory for tpu_custom_call.1']
    #allocation4 [shape = 's32[2]{0}', space=sflag, size = 0x8, scoped, tag = 'scoped memory for tpu_custom_call.1']
    #allocation5 [shape = 'u8[8192]{0}', space=vmem, size = 0x2000, scoped, tag = 'input window, operand 1']
    #allocation6 [shape = 's32[2]{0}', space=sflag, size = 0x8, scoped, tag = 'scoped memory for tpu_custom_call.1']
    #allocation7 [shape = 'u8[8192]{0}', space=vmem, size = 0x2000, scoped, tag = 'output window, operand 0']
    %8 = vsyncpa [#allocation3], 0
    %s9 = scalar_lea.sflag [#allocation3], 1
    %10 = vsyncpa %s9, 0
    %11 = vsyncpa [#allocation6], 0
    %s12 = scalar_lea.sflag [#allocation6], 1
    %13 = vsyncpa %s12, 0
    %14 = vsyncpa [#allocation4], 0
    %s15 = scalar_lea.sflag [#allocation4], 1
    %16 = vsyncpa %s15, 0
    loop: start=0, step=1, limit=4
    $region2: #{tpu_custom_call.1} parent=1 // loop_pre_header
      _
    $region3: #{tpu_custom_call.1} parent=1 // loop_header
      %s18 = sphi 0, %s22
      %p19 = scmp.ge.s32.totalorder %s18, 4
      %s25 = sphi 0, %s37
      %s26 = sphi 0, %s33
      %s27 = sphi 0, %s25
      %s28 = sphi 0, %s26
      %s29 = sphi 0, %s27
      %s30 = sphi 0, %s28
      %s42 = sphi 0, %s44
      %s45 = sphi 0, %s42
      %s46 = sphi 0, %s45
      %s62 = sphi 0, %s46
      %s68 = sphi 0, %s70
      %s71 = sphi 0, %s68
      %s72 = sphi 0, %s71
      %s88 = sphi 0, %s72
      %s94 = sphi 0, %s96
      %s97 = sphi 0, %s94
      %s98 = sphi 0, %s97
      %s114 = sphi 0, %s98
      %s122 = sphi 0, %s124
      %s125 = sphi 0, %s122
      %s126 = sphi 0, %s125
      %s142 = sphi 0, %s126
    $region4: #{tpu_custom_call.1} parent=1 // loop_header_branch
      %21 = sbr.rel (%p19) target = $region8
    $region5: #{tpu_custom_call.1} parent=1 // loop_body
      %s23 = ssub.s32 %s18, 1
      %s24 = ssub.s32 %s18, 2
      %s31 = sadd.s32 1, %s26
      %p32 = scmp.ge.s32.totalorder %s31, 1
      %s33 = scalar_select %p32, 0, %s31
      %s34 = sadd.s32 1, %s25
      %s35 = scalar_select %p32, %s34, %s25
      %p36 = scmp.ge.s32.totalorder %s35, 2
      %s37 = scalar_select %p36, 0, %s35
      %s38 = ssub.s32 %s25, %s37
      %s39 = ssub.s32 %s26, %s33
      %s40 = sor.u32 %s38, %s39
      %p41 = scmp.eq.s32.totalorder %s40, 0
      %s43 = sadd.s32 %s42, 1
      %s44 = scalar_select %p41, %s42, %s43
      %p47 = pneg %p41
      %p48 = scmp.eq.s32.totalorder %s18, 1
      %p49 = por %p47, %p48
      %p50 = scmp.ne.s32.totalorder %s42, %s45
      %p51 = scmp.eq.s32.totalorder %s18, 0
      %p52 = por %p50, %p51
      %p53 = scmp.ne.s32.totalorder %s42, %s45
      %p54 = scmp.eq.s32.totalorder %s23, 1
      %p55 = por %p53, %p54
      %p56 = scmp.ne.s32.totalorder %s45, %s46
      %p57 = scmp.eq.s32.totalorder %s23, 0
      %p58 = por %p56, %p57
      %p59 = scmp.ne.s32.totalorder %s45, %s46
      %p60 = scmp.eq.s32.totalorder %s24, 1
      %p61 = por %p59, %p60
      %p63 = scmp.ne.s32.totalorder %s46, %s62
      %p64 = scmp.eq.s32.totalorder %s24, 0
      %p65 = por %p63, %p64
      %s66 = ssub.s32 %s25, %s37
      %p67 = scmp.eq.s32.totalorder %s66, 0
      %s69 = sadd.s32 %s68, 1
      %s70 = scalar_select %p67, %s68, %s69
      %p73 = pneg %p67
      %p74 = scmp.eq.s32.totalorder %s18, 1
      %p75 = por %p73, %p74
      %p76 = scmp.ne.s32.totalorder %s68, %s71
      %p77 = scmp.eq.s32.totalorder %s18, 0
      %p78 = por %p76, %p77
      %p79 = scmp.ne.s32.totalorder %s68, %s71
      %p80 = scmp.eq.s32.totalorder %s23, 1
      %p81 = por %p79, %p80
      %p82 = scmp.ne.s32.totalorder %s71, %s72
      %p83 = scmp.eq.s32.totalorder %s23, 0
      %p84 = por %p82, %p83
      %p85 = scmp.ne.s32.totalorder %s71, %s72
      %p86 = scmp.eq.s32.totalorder %s24, 1
      %p87 = por %p85, %p86
      %p89 = scmp.ne.s32.totalorder %s72, %s88
      %p90 = scmp.eq.s32.totalorder %s24, 0
      %p91 = por %p89, %p90
      %s92 = ssub.s32 %s25, %s37
      %p93 = scmp.eq.s32.totalorder %s92, 0
      %s95 = sadd.s32 %s94, 1
      %s96 = scalar_select %p93, %s94, %s95
      %p99 = pneg %p93
      %p100 = scmp.eq.s32.totalorder %s18, 1
      %p101 = por %p99, %p100
      %p102 = scmp.ne.s32.totalorder %s94, %s97
      %p103 = scmp.eq.s32.totalorder %s18, 0
      %p104 = por %p102, %p103
      %p105 = scmp.ne.s32.totalorder %s94, %s97
      %p106 = scmp.eq.s32.totalorder %s23, 1
      %p107 = por %p105, %p106
      %p108 = scmp.ne.s32.totalorder %s97, %s98
      %p109 = scmp.eq.s32.totalorder %s23, 0
      %p110 = por %p108, %p109
      %p111 = scmp.ne.s32.totalorder %s97, %s98
      %p112 = scmp.eq.s32.totalorder %s24, 1
      %p113 = por %p111, %p112
      %p115 = scmp.ne.s32.totalorder %s98, %s114
      %p116 = scmp.eq.s32.totalorder %s24, 0
      %p117 = por %p115, %p116
      %s118 = ssub.s32 %s25, %s37
      %s119 = ssub.s32 %s26, %s33
      %s120 = sor.u32 %s118, %s119
      %p121 = scmp.eq.s32.totalorder %s120, 0
      %s123 = sadd.s32 %s122, 1
      %s124 = scalar_select %p121, %s122, %s123
      %p127 = pneg %p121
      %p128 = scmp.eq.s32.totalorder %s18, 1
      %p129 = por %p127, %p128
      %p130 = scmp.ne.s32.totalorder %s122, %s125
      %p131 = scmp.eq.s32.totalorder %s18, 0
      %p132 = por %p130, %p131
      %p133 = scmp.ne.s32.totalorder %s122, %s125
      %p134 = scmp.eq.s32.totalorder %s23, 1
      %p135 = por %p133, %p134
      %p136 = scmp.ne.s32.totalorder %s125, %s126
      %p137 = scmp.eq.s32.totalorder %s23, 0
      %p138 = por %p136, %p137
      %p139 = scmp.ne.s32.totalorder %s125, %s126
      %p140 = scmp.eq.s32.totalorder %s24, 1
      %p141 = por %p139, %p140
      %p143 = scmp.ne.s32.totalorder %s126, %s142
      %p144 = scmp.eq.s32.totalorder %s24, 0
      %p145 = por %p143, %p144
      %p146 = scmp.le.s32.totalorder 1, %s18
      %p147 = scmp.lt.s32.totalorder %s18, 3
      %p148 = pnand %p146, %p147
      %p149 = pneg %p148
      // Predicated region
      $region9: #{tpu_custom_call.1} parent=5 // pred_check
        _
      $region10: #{tpu_custom_call.1} parent=5 // pred_check_branch
        %151 = sbr.rel (%p148) target = $region12
      $region11: #{tpu_custom_call.1} parent=5 // pred_region
        %s152 = ssub.s32 %s18, 1
      $region12: #{tpu_custom_call.1} parent=5 // pred_fallthru
        _
      %p153 = scmp.lt.s32.totalorder %s18, 2
      // Predicated region
      $region13: #{tpu_custom_call.1} parent=5 // pred_check
        %p154 = pneg %p153
      $region14: #{tpu_custom_call.1} parent=5 // pred_check_branch
        %156 = sbr.rel (%p154) target = $region16
      $region15: #{tpu_custom_call.1} parent=5 // pred_region
        // Predicated region
        $region17: #{tpu_custom_call.1} parent=15 // pred_check
          %p157 = pneg %p52
        $region18: #{tpu_custom_call.1} parent=15 // pred_check_branch
          %159 = sbr.rel (%p157) target = $region20
        $region19: #{tpu_custom_call.1} parent=15 // pred_region
          %s160 = sand.u32 %s42, 1
          %s161 = scalar_lea.sflag [#allocation3], %s160
          %s162 = sand.u32 %s42, 1
          %s163 = smul.addr %s162, 8
          %s164 = scalar_lea.vmem [#allocation2], %s163
          %s166 = ssub.s32 128, 128
          %167 = vsyncadd %s161, %s166
          %s168 = sadd.s32 %s26, %s25
          %s169 = smul.addr %s168, 128
          %s170 = scalar_lea.hbm %s0, %s169
          %s172 = sshll.u32 %s164, 4
          %s173 = int_to_ptr.vmem [resolvable:$true] %s172
          %175 = dma.hbm_to_vmem [thread:$0]  %s170, 128, %s173, %s161
        $region20: #{tpu_custom_call.1} parent=15 // pred_fallthru
          _
        // Predicated region
        $region21: #{tpu_custom_call.1} parent=15 // pred_check
          %p176 = pneg %p78
        $region22: #{tpu_custom_call.1} parent=15 // pred_check_branch
          %178 = sbr.rel (%p176) target = $region24
        $region23: #{tpu_custom_call.1} parent=15 // pred_region
          %s179 = sand.u32 %s68, 1
          %s180 = scalar_lea.sflag [#allocation6], %s179
          %s181 = sand.u32 %s68, 1
          %s182 = smul.addr %s181, 8
          %s183 = scalar_lea.vmem [#allocation5], %s182
          %s185 = ssub.s32 128, 128
          %186 = vsyncadd %s180, %s185
          %s187 = smul.addr %s25, 2
          %s188 = smul.addr %s187, 64
          %s189 = scalar_lea.hbm %s1, %s188
          %s190 = sshll.u32 %s183, 4
          %s191 = int_to_ptr.vmem [resolvable:$true] %s190
          %196 = dma.hbm_to_vmem [thread:$0]  %s189, 128, %s191, %s180, 64, 64, 4
        $region24: #{tpu_custom_call.1} parent=15 // pred_fallthru
          _
        // Predicated region
        $region25: #{tpu_custom_call.1} parent=15 // pred_check
          %p197 = pneg %p104
        $region26: #{tpu_custom_call.1} parent=15 // pred_check_branch
          %199 = sbr.rel (%p197) target = $region28
        $region27: #{tpu_custom_call.1} parent=15 // pred_region
          %p200 = scmp.lt.s32.totalorder %s25, 1
          %s201 = scalar_select %p200, %s25, 1
          %s202 = scalar_lea.vmem %s2, %s201
        $region28: #{tpu_custom_call.1} parent=15 // pred_fallthru
          _
      $region16: #{tpu_custom_call.1} parent=5 // pred_fallthru
        _
      %p203 = scmp.le.s32.totalorder 1, %s18
      %p204 = scmp.lt.s32.totalorder %s18, 3
      %p205 = pnand %p203, %p204
      %p206 = pneg %p205
      // Predicated region
      $region29: #{tpu_custom_call.1} parent=5 // pred_check
        _
      $region30: #{tpu_custom_call.1} parent=5 // pred_check_branch
        %208 = sbr.rel (%p205) target = $region32
      $region31: #{tpu_custom_call.1} parent=5 // pred_region
        %s209 = ssub.s32 %s18, 1
        %s210 = sand.u32 %s45, 1
        %s211 = scalar_lea.sflag [#allocation3], %s210
        %s212 = sand.u32 %s45, 1
        %s213 = smul.addr %s212, 8
        %s214 = scalar_lea.vmem [#allocation2], %s213
        // Predicated region
        $region33: #{tpu_custom_call.1} parent=31 // pred_check
          %p215 = pneg %p58
        $region34: #{tpu_custom_call.1} parent=31 // pred_check_branch
          %217 = sbr.rel (%p215) target = $region36
        $region35: #{tpu_custom_call.1} parent=31 // pred_region
          %218 = dma.done %s211, 128
        $region36: #{tpu_custom_call.1} parent=31 // pred_fallthru
          _
        %s219 = sand.u32 %s71, 1
        %s220 = scalar_lea.sflag [#allocation6], %s219
        %s221 = sand.u32 %s71, 1
        %s222 = smul.addr %s221, 8
        %s223 = scalar_lea.vmem [#allocation5], %s222
        // Predicated region
        $region37: #{tpu_custom_call.1} parent=31 // pred_check
          %p224 = pneg %p84
        $region38: #{tpu_custom_call.1} parent=31 // pred_check_branch
          %226 = sbr.rel (%p224) target = $region40
        $region39: #{tpu_custom_call.1} parent=31 // pred_region
          %227 = dma.done %s220, 128
        $region40: #{tpu_custom_call.1} parent=31 // pred_fallthru
          _
        %s228 = sand.u32 %s45, 1
        %s229 = scalar_lea.sflag [#allocation3], %s228
        %s230 = sand.u32 %s45, 1
        %s231 = smul.addr %s230, 8
        %s232 = scalar_lea.vmem [#allocation2], %s231
        %p233 = pneg %p58
        %p234 = pneg %p55
        %s235 = sand.u32 %s71, 1
        %s236 = scalar_lea.sflag [#allocation6], %s235
        %s237 = sand.u32 %s71, 1
        %s238 = smul.addr %s237, 8
        %s239 = scalar_lea.vmem [#allocation5], %s238
        %p240 = pneg %p84
        %p241 = pneg %p81
        %p242 = scmp.lt.s32.totalorder %s27, 1
        %s243 = scalar_select %p242, %s27, 1
        %s244 = scalar_lea.vmem %s2, %s243
        %p245 = pneg %p110
        %p246 = pneg %p107
        %p247 = pneg %p138
        %p248 = pneg %p135
        %s249 = sand.u32 %s125, 1
        %s250 = scalar_lea.sflag [#allocation4], %s249
        %s251 = sand.u32 %s125, 1
        %s252 = smul.addr %s251, 8
        %s253 = scalar_lea.vmem [#allocation7], %s252
        %p254 = scmp.lt.s32.totalorder %s27, 1
        %s255 = scalar_select %p254, %s27, 1
        %s256 = scalar_lea.vmem %s2, %s255
        %v257 = vld [vmem:[%s214] sm:$0xff]
        %vm258 = vcmask 130048
        %v259 = vsel %vm258, %v257, -inf
        %260 = vmax.xlane.f32.xlu0 %v259
        %v261 = vpop.xlane.xlu0 %260
        %v262 = vsub.f32 %v257, %v261
        %v263 = vmul.f32 %v262, 1.442695
        %v264 = vpow.pop %v263
        %v265 = vsel %vm258, %v264, 0.0
        %266 = vadd.xlane.f32.xlu0 %v265
        %v267 = vpop.xlane.xlu0 %266
        %v268 = vlog2.pop %v267
        %v269 = vmul.f32 %v268, 0.6931472
        %v270 = vadd.f32 %v261, %v269
        %v271 = vld [vmem:[%s223] sm:$0xf]
        %v272 = vld [vmem:[%s223 + $0x4] sm:$0xf]
        %v273 = vunpack.c.l.bf16 %v271
        %v274 = vunpack.c.l.bf16 %v272
        %v276 = vsel %vm258, %v257, 0
        %278 = vmatprep.subr.mxu0 0.0
        %279 = vmatpush1.msra.mxu0 %v273
        %280 = vmatprep.subr.mxu0 0.0
        %281 = vmatpush1.msra.mxu0 %v274
        %282 = vmatprep.subr.mxu0 0.0
        %283 = vmatpush1.msra.mxu0 0.0
        %284 = vmatprep.subr.mxu0 0.0
        %285 = vmatpush1.msra.mxu0 0.0
        %286 = vmatprep.subr.mxu0 0.0
        %287 = vmatpush1.msra.mxu0 0.0
        %288 = vmatprep.subr.mxu0 0.0
        %289 = vmatpush1.msra.mxu0 0.0
        %290 = vmatprep.subr.mxu0 0.0
        %291 = vmatpush1.msra.mxu0 0.0
        %292 = vmatprep.subr.mxu0 0.0
        %293 = vmatpush1.msra.mxu0 0.0
        %294 = vmatprep.subr.mxu0 0.0
        %295 = vmatpush1.msra.mxu0 0.0
        %296 = vmatprep.subr.mxu0 0.0
        %297 = vmatpush1.msra.mxu0 0.0
        %298 = vmatprep.subr.mxu0 0.0
        %299 = vmatpush1.msra.mxu0 0.0
        %300 = vmatprep.subr.mxu0 0.0
        %301 = vmatpush1.msra.mxu0 0.0
        %302 = vmatprep.subr.mxu0 0.0
        %303 = vmatpush1.msra.mxu0 0.0
        %304 = vmatprep.subr.mxu0 0.0
        %305 = vmatpush1.msra.mxu0 0.0
        %306 = vmatprep.subr.mxu0 0.0
        %307 = vmatpush1.msra.mxu0 0.0
        %308 = vmatprep.subr.mxu0 0.0
        %309 = vmatpush1.msra.mxu0 0.0
        %310 = vmatprep.subr.mxu0 0.0
        %311 = vmatpush1.msra.mxu0 0.0
        %312 = vmatprep.subr.mxu0 0.0
        %313 = vmatpush1.msra.mxu0 0.0
        %314 = vmatprep.subr.mxu0 0.0
        %315 = vmatpush1.msra.mxu0 0.0
        %316 = vmatprep.subr.mxu0 0.0
        %317 = vmatpush1.msra.mxu0 0.0
        %318 = vmatprep.subr.mxu0 0.0
        %319 = vmatpush1.msra.mxu0 0.0
        %320 = vmatprep.subr.mxu0 0.0
        %321 = vmatpush1.msra.mxu0 0.0
        %322 = vmatprep.subr.mxu0 0.0
        %323 = vmatpush1.msra.mxu0 0.0
        %324 = vmatprep.subr.mxu0 0.0
        %325 = vmatpush1.msra.mxu0 0.0
        %326 = vmatprep.subr.mxu0 0.0
        %327 = vmatpush1.msra.mxu0 0.0
        %328 = vmatprep.subr.mxu0 0.0
        %329 = vmatpush1.msra.mxu0 0.0
        %330 = vmatprep.subr.mxu0 0.0
        %331 = vmatpush1.msra.mxu0 0.0
        %332 = vmatprep.subr.mxu0 0.0
        %333 = vmatpush1.msra.mxu0 0.0
        %334 = vmatprep.subr.mxu0 0.0
        %335 = vmatpush1.msra.mxu0 0.0
        %336 = vmatprep.subr.mxu0 0.0
        %337 = vmatpush1.msra.mxu0 0.0
        %338 = vmatprep.subr.mxu0 0.0
        %339 = vmatpush1.msra.mxu0 0.0
        %340 = vmatprep.subr.mxu0 0.0
        %341 = vmatpush1.msra.mxu0 0.0
        %342 = vmatprep.mubr.f32.mxu0 0.0
        %343 = vmatmul.mubr.f32.gmra.mrb[0].mxu0 %v276
        %v344 = vpop.f32.mrb[0].mxu0
        %v345 = vadd.f32 0.0, %v344
        %v346 = vpop.f32.mrb[0].mxu0
        %347 = vdwg.mxu0
        %v348 = vsub.f32 %v345, %v270
        %v349 = vld [vmem:[%s256] sm:$0x1]
        %v351 = vlaneseq
        %v352 = vshrl.u32 %v351, 7
        %v353 = vsub.s32 0, %v352
        %v354 = vrot.slane %v349, %v353
        %v356 = vadd.f32 %v348, %v354
        %357 = vst [vmem:[%s253] sm:$0xff] %v356
        %s358 = sand.u32 %s125, 1
        %s359 = scalar_lea.sflag [#allocation4], %s358
        %s360 = sand.u32 %s125, 1
        %s361 = smul.addr %s360, 8
        %s362 = scalar_lea.vmem [#allocation7], %s361
        // Predicated region
        $region41: #{tpu_custom_call.1} parent=31 // pred_check
          %p363 = pneg %p135
        $region42: #{tpu_custom_call.1} parent=31 // pred_check_branch
          %365 = sbr.rel (%p363) target = $region44
        $region43: #{tpu_custom_call.1} parent=31 // pred_region
          %s367 = ssub.s32 128, 128
          %368 = vsyncadd %s359, %s367
          %s369 = sadd.s32 %s28, %s27
          %s370 = smul.addr %s369, 128
          %s371 = scalar_lea.hbm %s3, %s370
          %s373 = sshll.u32 %s362, 4
          %s374 = int_to_ptr.vmem [resolvable:$true] %s373
          %376 = dma.vmem_to_hbm [thread:$0]  %s374, 128, %s371, %s359
        $region44: #{tpu_custom_call.1} parent=31 // pred_fallthru
          _
      $region32: #{tpu_custom_call.1} parent=5 // pred_fallthru
        _
      %p377 = scmp.le.s32.totalorder 2, %s18
      // Predicated region
      $region45: #{tpu_custom_call.1} parent=5 // pred_check
        %p378 = pneg %p377
      $region46: #{tpu_custom_call.1} parent=5 // pred_check_branch
        %380 = sbr.rel (%p378) target = $region48
      $region47: #{tpu_custom_call.1} parent=5 // pred_region
        %s381 = ssub.s32 %s18, 2
        // Predicated region
        $region49: #{tpu_custom_call.1} parent=47 // pred_check
          %p382 = pneg %p141
        $region50: #{tpu_custom_call.1} parent=47 // pred_check_branch
          %384 = sbr.rel (%p382) target = $region52
        $region51: #{tpu_custom_call.1} parent=47 // pred_region
          %s385 = sand.u32 %s126, 1
          %s386 = scalar_lea.sflag [#allocation4], %s385
          %s387 = sand.u32 %s126, 1
          %s388 = smul.addr %s387, 8
          %s389 = scalar_lea.vmem [#allocation7], %s388
          %390 = dma.done %s386, 128
        $region52: #{tpu_custom_call.1} parent=47 // pred_fallthru
          _
      $region48: #{tpu_custom_call.1} parent=5 // pred_fallthru
        _
    $region6: #{tpu_custom_call.1} parent=1 // loop_footer
      %s22 = sadd.s32 1, %s18
    $region7: #{tpu_custom_call.1} parent=1 // loop_footer_branch
      %17 = sbr.rel target = $region3
    $region8: #{tpu_custom_call.1} parent=1 // loop_exit
      _
    %391 = vsyncpa [#allocation3], 1
    %s392 = scalar_lea.sflag [#allocation3], 1
    %393 = vsyncpa %s392, 1
    %394 = vsyncpa [#allocation6], 1
    %s395 = scalar_lea.sflag [#allocation6], 1
    %396 = vsyncpa %s395, 1
    %397 = vsyncpa [#allocation4], 1
    %s398 = scalar_lea.sflag [#allocation4], 1
    %399 = vsyncpa %s398, 1

</llo_original>
